<compile_context>
chip_gen: v5e
topology: v5e:2x2
jax: 0.10.0
libtpu: 0.0.40
codegen_flags: <defaults>
</compile_context>

<pallas_src>
import jax
import jax.numpy as jnp
from jax import lax
from jax.experimental import pallas as pl
from jax.experimental.pallas import tpu as pltpu


# ----------------------------------------------------------------------------
# Kernel
# ----------------------------------------------------------------------------

def _one_hot_kernel(idx_ref, o_ref):
    # idx_ref: (1, row_tile) int32, lane-dense.
    # o_ref:   (row_tile, depth_tile) float output block.
    rt, dt = o_ref.shape
    d0 = pl.program_id(1) * dt                      # depth offset of this block
    # Lane-major -> sublane-major relayout of the tiny index vector (32 KiB at
    # rt=8192); XLU/VPU work fully hidden under the HBM store.
    idx_col = idx_ref[...].reshape(rt, 1)           # (rt, 1)
    cols = lax.broadcasted_iota(jnp.int32, (rt, dt), 1) + d0
    o_ref[...] = (cols == idx_col).astype(o_ref.dtype)


# ----------------------------------------------------------------------------
# Wrapper
# ----------------------------------------------------------------------------

def _round_up(x, m):
    return (x + m - 1) // m * m


def one_hot(indices, depth, *, dtype=jnp.float32,
            block_elems=1 << 20, max_depth_tile=1024, min_pallas_rows=1024):
    """One-hot encode integer `indices` to shape indices.shape + (depth,)."""
    orig_shape = indices.shape
    idx_flat = indices.reshape(-1).astype(jnp.int32)
    R = idx_flat.shape[0]

    # Tiny problems: a standalone pallas_call launch dominates; let XLA fuse
    # the iota/compare into the consumer instead.
    if R < min_pallas_rows:
        return jax.nn.one_hot(idx_flat, depth, dtype=dtype).reshape(
            *orig_shape, depth)

    # ---- depth tiling (lane axis): multiples of 128, capped ----------------
    depth_tile = min(_round_up(depth, 128), max_depth_tile)
    n_depth_blocks = pl.cdiv(depth, depth_tile)

    # ---- row tiling (sublane axis) -----------------------------------------
    # Budget ~block_elems output elements per block (~4 MiB f32): big enough
    # to amortize the per-grid-step overhead, small enough that the
    # double-buffered output + intermediates stay well under 32 MiB VMEM.
    rows_budget = max(block_elems // depth_tile, 128)
    rows_budget = (rows_budget // 128) * 128      # idx block last dim % 128
    if R <= rows_budget:
        # Single row block: block dims equal the full array dims -> no
        # padding and no alignment constraints.
        row_tile = R
        R_pad = R
    else:
        row_tile = rows_budget
        R_pad = _round_up(R, row_tile)
    n_row_blocks = R_pad // row_tile

    if R_pad != R:
        # Pad only the tiny (4 B/row) index vector; the big output is NOT
        # padded -- Pallas masks the stores of the final partial row block.
        idx_flat = jnp.pad(idx_flat, (0, R_pad - R), constant_values=-1)
    idx2d = idx_flat.reshape(1, R_pad)            # lane-dense layout

    out = pl.pallas_call(
        _one_hot_kernel,
        out_shape=jax.ShapeDtypeStruct((R, depth), dtype),
        grid=(n_row_blocks, n_depth_blocks),
        in_specs=[pl.BlockSpec((1, row_tile), lambda r, d: (0, r))],
        out_specs=pl.BlockSpec((row_tile, depth_tile), lambda r, d: (r, d)),
        compiler_params=pltpu.CompilerParams(
            dimension_semantics=("parallel", "parallel"),
            vmem_limit_bytes=32 * 1024 * 1024,
        ),
    )(idx2d)

    return out.reshape(*orig_shape, depth)


# ----------------------------------------------------------------------------
# Pure-JAX reference (identity-embedding gather, same as nn.Embedding(eye))
# ----------------------------------------------------------------------------

def one_hot_reference(indices, depth, dtype=jnp.float32):
    eye = jnp.eye(depth, dtype=dtype)
    return eye[indices]


# ----------------------------------------------------------------------------
# Main
# ----------------------------------------------------------------------------

if __name__ == "__main__":
    key = jax.random.PRNGKey(0)
    k1, k2 = jax.random.split(key)

    depth = 128   # lane-dense: output last dim is a full 128-lane store

    # Small case matching the module's usage (batch=2, seq=8).  Force the
    # Pallas path (min_pallas_rows=0) so the kernel itself is exercised; by
    # default such tiny inputs route to fused XLA.
    idx = jax.random.randint(k1, (2, 8), 0, depth, dtype=jnp.int32)
    out = jax.block_until_ready(one_hot(idx, depth, min_pallas_rows=0))
    ref = one_hot_reference(idx, depth)
    assert out.shape == (2, 8, depth) and out.dtype == jnp.float32
    assert bool(jnp.array_equal(out, ref)), "one_hot mismatch (small case)"

    # bf16 output option (halves write traffic; 0/1 exact in bf16).
    out_bf16 = jax.block_until_ready(
        one_hot(idx, depth, dtype=jnp.bfloat16, min_pallas_rows=0))
    assert out_bf16.dtype == jnp.bfloat16
    assert bool(jnp.array_equal(out_bf16.astype(jnp.float32), ref)), \
        "one_hot mismatch (bf16 case)"

    # Larger case: multi-block row grid (row_tile=8192), padded index tail and
    # masked partial final output block (9600 rows = 8192 + 1408).
    idx_big = jax.random.randint(k2, (8, 1200), 0, depth, dtype=jnp.int32)
    out_big = jax.block_until_ready(one_hot(idx_big, depth))
    ref_big = one_hot_reference(idx_big, depth)
    assert out_big.shape == (8, 1200, depth)
    assert bool(jnp.array_equal(out_big, ref_big)), "one_hot mismatch (tiled case)"

    print("KERNEL_OK")
</pallas_src>

<mosaic_0001>
module attributes {stable_mosaic.version = 11 : i64} {
  func.func @_one_hot_kernel(%arg0: i32, %arg1: i32, %arg2: memref<1x16xi32, #tpu.memory_space<vmem>>, %arg3: memref<16x128xf32, #tpu.memory_space<vmem>>) attributes {dimension_semantics = [#tpu.dimension_semantics<parallel>, #tpu.dimension_semantics<parallel>], iteration_bounds = array<i64: 1, 1>, scalar_prefetch = 0 : i64, scratch_operands = 0 : i64, tpu.core_type = #tpu.core_type<tc>, window_params = [{transform_indices = @transform_0, window_bounds = array<i64: 1, 16>}, {transform_indices = @transform_1, window_bounds = array<i64: 16, 128>}]} {
    %c128_i32 = arith.constant 128 : i32
    %0 = arith.muli %arg1, %c128_i32 : i32
    %c0 = arith.constant 0 : index
    %c0_0 = arith.constant 0 : index
    %1 = vector.load %arg2[%c0, %c0_0] : memref<1x16xi32, #tpu.memory_space<vmem>>, vector<1x16xi32>
    %2 = vector.shape_cast %1 : vector<1x16xi32> to vector<16x1xi32>
    %3 = tpu.iota {dimensions = array<i32: 1>} : vector<16x128xi32>
    %4 = vector.broadcast %0 : i32 to vector<16x128xi32>
    %5 = arith.addi %3, %4 : vector<16x128xi32>
    %6 = vector.broadcast %2 : vector<16x1xi32> to vector<16x128xi32>
    %7 = arith.cmpi eq, %5, %6 : vector<16x128xi32>
    %8 = arith.extui %7 : vector<16x128xi1> to vector<16x128xi32>
    %9 = arith.sitofp %8 : vector<16x128xi32> to vector<16x128xf32>
    %c0_1 = arith.constant 0 : index
    %c0_2 = arith.constant 0 : index
    %10 = vector.load %arg3[%c0_1, %c0_2] : memref<16x128xf32, #tpu.memory_space<vmem>>, vector<16x128xf32>
    tpu.vector_store %arg3[%c0_1, %c0_2], %9 {strides = array<i32>} : memref<16x128xf32, #tpu.memory_space<vmem>>, vector<16x128xf32>,
    return
  }
  func.func @transform_0(%arg0: i32, %arg1: i32) -> (i32, i32) {
    %c0_i32 = arith.constant 0 : i32
    %c0_i32_0 = arith.constant 0 : i32
    return %c0_i32, %arg0 : i32, i32
  }
  func.func @transform_1(%arg0: i32, %arg1: i32) -> (i32, i32) {
    %c0_i32 = arith.constant 0 : i32
    return %arg0, %arg1 : i32, i32
  }
}

</mosaic_0001>

<llo_original>
// kernel: tpu_custom_call.1
$region0: #{tpu_custom_call.1}
  #allocation0 [shape = 'u32[]', space=smem, size = 0x4, offset = 0x4, fixed_abs, tag = 'smem constant byte address 0x4 - core index']
  #allocation1 [shape = 'u32[72,128]{1,0:T(1,128)}', space=vmem, size = 0x9000, scoped, tag = 'internal scratch']
  %s0 = inlined_call_operand.hbm [shape: s32[1,16], index: 0, kind: input, shape index: {}]
  %s1 = inlined_call_operand.hbm [shape: f32[16,128], index: 1, kind: output, shape index: {}]
  %s2 = sld [smem:[#allocation0]]
  $region18: #{tpu_custom_call.1} parent=0
    _
  %s4 = ssub.s32 1, %s2
  %s5 = scalar_select 0, %s4, %s2
  $region1: #{tpu_custom_call.1} parent=0
    #allocation2 [shape = 'u8[512]{0}', space=vmem, size = 0x400, scoped, tag = 'input window, operand 0, single buffered']
    #allocation3 [shape = 's32[1]{0}', space=sflag, size = 0x4, scoped, tag = 'scoped memory for tpu_custom_call.1']
    #allocation4 [shape = 's32[1]{0}', space=sflag, size = 0x4, scoped, tag = 'scoped memory for tpu_custom_call.1']
    #allocation5 [shape = 'u8[8192]{0}', space=vmem, size = 0x2000, scoped, tag = 'output window, operand 0, single buffered']
    %6 = vsyncpa [#allocation3], 0
    %7 = vsyncpa [#allocation4], 0
    // Predicated region
    $region2: #{tpu_custom_call.1} parent=1 // pred_check
      _
    $region3: #{tpu_custom_call.1} parent=1 // pred_check_branch
      %9 = sbr.rel (0) target = $region5
    $region4: #{tpu_custom_call.1} parent=1 // pred_region
      %11 = vsyncadd [#allocation3], 0
      %s13 = sshll.u32 %s0, 4
      %s14 = int_to_ptr.hbm [resolvable:$true] %s13
      %s15 = sshll.u32 [#allocation2], 4
      %s16 = int_to_ptr.vmem [resolvable:$true] %s15
      %18 = dma.hbm_to_vmem [thread:$0]  %s14, 16, %s16, [#allocation3]
    $region5: #{tpu_custom_call.1} parent=1 // pred_fallthru
      _
    // Predicated region
    $region6: #{tpu_custom_call.1} parent=1 // pred_check
      _
    $region7: #{tpu_custom_call.1} parent=1 // pred_check_branch
      %20 = sbr.rel (0) target = $region9
    $region8: #{tpu_custom_call.1} parent=1 // pred_region
      %22 = dma.done [#allocation3], 16
    $region9: #{tpu_custom_call.1} parent=1 // pred_fallthru
      _
    %s23 = smul.u32 0, 128
    %v24 = vld [vmem:[#allocation2] sm:$0x1]
    %v25 = vperm.slane %v24, 0
    %v26 = vlaneseq
    %v27 = vshrl.u32 %v26, 7
    %29 = vset.pattern.permute.xlu0 %v27
    %30 = vperm.xlu0 %29, %v25
    %v31 = vpop.permute.xlu0 %30
    %v32 = vlaneseq
    %v33 = vshrl.u32 %v32, 7
    %v34 = vadd.s32 %v33, 8
    %35 = vset.pattern.permute.xlu0 %v34
    %36 = vperm.xlu0 %35, %v25
    %v37 = vpop.permute.xlu0 %36
    %v38 = vlaneseq
    %v39 = vand.u32 %v38, 127
    %v40 = vstv %s23
    %v41 = vadd.s32 %v39, %v40
    %vm42 = vcmp.eq.s32.totalorder %v41, %v31
    %vm43 = vcmp.eq.s32.totalorder %v41, %v37
    %v44 = vsel %vm42, 1, 0
    %v45 = vsel %vm43, 1, 0
    %v46 = vcvt.s32.f32 %v44
    %v47 = vcvt.s32.f32 %v45
    %48 = vst [vmem:[#allocation5] sm:$0xff] %v46
    %49 = vst [vmem:[#allocation5 + $0x8] sm:$0xff] %v47
    // Predicated region
    $region10: #{tpu_custom_call.1} parent=1 // pred_check
      _
    $region11: #{tpu_custom_call.1} parent=1 // pred_check_branch
      %51 = sbr.rel (0) target = $region13
    $region12: #{tpu_custom_call.1} parent=1 // pred_region
      %53 = vsyncadd [#allocation4], 0
      %s54 = sshll.u32 [#allocation5], 4
      %s55 = int_to_ptr.vmem [resolvable:$true] %s54
      %s56 = sshll.u32 %s1, 4
      %s57 = int_to_ptr.hbm [resolvable:$true] %s56
      %62 = dma.vmem_to_hbm [thread:$0]  %s55, 256, %s57, [#allocation4], 128, 128, 8
    $region13: #{tpu_custom_call.1} parent=1 // pred_fallthru
      _
    // Predicated region
    $region14: #{tpu_custom_call.1} parent=1 // pred_check
      _
    $region15: #{tpu_custom_call.1} parent=1 // pred_check_branch
      %64 = sbr.rel (0) target = $region17
    $region16: #{tpu_custom_call.1} parent=1 // pred_region
      %66 = dma.done [#allocation4], 256
    $region17: #{tpu_custom_call.1} parent=1 // pred_fallthru
      _
    %67 = vsyncpa [#allocation3], 1
    %68 = vsyncpa [#allocation4], 1

</llo_original>
